<compile_context>
chip_gen: v7x
topology: tpu7x:2x2x1
jax: 0.10.0
libtpu: 0.0.40
codegen_flags: <defaults>
</compile_context>

<pallas_src>
import jax
import jax.numpy as jnp
from jax.experimental import pallas as pl
from jax.experimental.pallas import tpu as pltpu


def _dec_head_kernel(x_ref, w_ref, b_ref, o_ref):
    # x_ref: (TB, n_latent)    native dtype
    # w_ref: (n_latent, Npad)  fully folded fc+conv+BN weight, native dtype
    # b_ref: (1, Npad)         fully folded bias, f32
    # o_ref: (TB, Npad)
    acc = jnp.dot(x_ref[...], w_ref[...], preferred_element_type=jnp.float32)
    o_ref[...] = (acc + b_ref[...]).astype(o_ref.dtype)


def _sublane(dtype):
    # Sublane packing of the dtype: 8 for f32, 16 for bf16, 32 for int8/fp8.
    return max(8, 32 // jnp.dtype(dtype).itemsize)


def resnet_dec_head(x, fc_w, fc_b, conv_w, conv_b,
                    bn_gamma, bn_beta, bn_mean, bn_var, eps=1e-5,
                    block_b=None, vmem_limit_bytes=None):
    """x: (B, n_latent); fc_w: (C, n_latent); fc_b: (C,);
    conv_w: (C, 1, k, k) ConvTranspose2d depthwise weight; conv_b: (C,);
    BN params/stats: (C,).  Returns (B, C, k, k)."""
    B, n_latent = x.shape
    C = fc_w.shape[0]
    k = conv_w.shape[-1]
    HW = k * k
    N = C * HW

    f32 = jnp.float32

    # ---- host-side, one-time full fold: Linear + depthwise stamp + BN ----
    s = bn_gamma.astype(f32) / jnp.sqrt(bn_var.astype(f32) + eps)          # (C,)
    kp = conv_w.reshape(C, HW).astype(f32) * s[:, None]                    # (C, HW)
    bp = (conv_b.astype(f32) - bn_mean.astype(f32)) * s + bn_beta.astype(f32)  # (C,)

    # out[b, c*HW+h] = sum_l x[b,l] * fc_w[c,l] * kp[c,h]
    #                  + fc_b[c] * kp[c,h] + bp[c]
    w_fused = jnp.einsum("cl,ch->lch", fc_w.astype(f32), kp).reshape(n_latent, N)
    b_fused = (fc_b.astype(f32)[:, None] * kp + bp[:, None]).reshape(1, N)

    # ---- lane-dense output: pad last dim to a multiple of 128 ----
    N_pad = ((N + 127) // 128) * 128
    if N_pad != N:
        w_fused = jnp.pad(w_fused, ((0, 0), (0, N_pad - N)))
        b_fused = jnp.pad(b_fused, ((0, 0), (0, N_pad - N)))

    x_dtype = x.dtype
    itemsize = jnp.dtype(x_dtype).itemsize
    w_fused = w_fused.astype(x_dtype)   # native MXU path (bf16 if x is bf16)
    # b_fused stays f32; it is added to the f32 accumulator.

    # ---- batch tile: budget on real live VMEM per row ----
    sub = _sublane(x_dtype)
    # per-row: double-buffered x tile + double-buffered out tile + f32 accumulator
    row_live = 2 * (n_latent * itemsize + N_pad * itemsize) + N_pad * 4
    if block_b is None:
        budget = 8 << 20                      # ~8 MiB of batch-dependent live VMEM
        tb = max(sub, budget // max(row_live, 1))
        tb -= tb % sub
        block_b = tb
    if B >= 2 * sub:
        # Guarantee >= 2 grid steps so the "parallel" axis can shard across
        # both v7x TensorCores.
        half = ((pl.cdiv(B, 2) + sub - 1) // sub) * sub
        TB = min(block_b, half, B)
    else:
        TB = min(block_b, B)
    grid = (pl.cdiv(B, TB),)

    resident = n_latent * N_pad * itemsize + N_pad * 4
    live = TB * row_live + resident
    if vmem_limit_bytes is None:
        vmem_limit_bytes = min(max(int(1.5 * live) + (2 << 20), 8 << 20), 64 << 20)

    cost = pl.CostEstimate(
        flops=2 * B * n_latent * N_pad,
        transcendentals=0,
        bytes_accessed=(B * n_latent * itemsize       # x read
                        + n_latent * N_pad * itemsize  # W_fused read
                        + N_pad * 4                    # bias read
                        + B * N_pad * itemsize))       # output write (dominant)

    out2d = pl.pallas_call(
        _dec_head_kernel,
        out_shape=jax.ShapeDtypeStruct((B, N_pad), x_dtype),
        grid=grid,
        in_specs=[
            pl.BlockSpec((TB, n_latent), lambda i: (i, 0)),     # streamed per tile
            pl.BlockSpec((n_latent, N_pad), lambda i: (0, 0)),  # VMEM-resident
            pl.BlockSpec((1, N_pad), lambda i: (0, 0)),         # VMEM-resident
        ],
        out_specs=pl.BlockSpec((TB, N_pad), lambda i: (i, 0)),
        compiler_params=pltpu.CompilerParams(
            dimension_semantics=("parallel",),
            vmem_limit_bytes=vmem_limit_bytes),
        cost_estimate=cost,
    )(x, w_fused, b_fused)

    if N_pad != N:
        out2d = out2d[:, :N]
    return out2d.reshape(B, C, k, k)


def reference(x, fc_w, fc_b, conv_w, conv_b, bn_gamma, bn_beta, bn_mean, bn_var, eps):
    B, _ = x.shape
    C = fc_w.shape[0]
    k = conv_w.shape[-1]
    y = x @ fc_w.T + fc_b                                           # (B, C)
    y = y.reshape(B, C, 1, 1)
    conv = y * conv_w.reshape(1, C, k, k) + conv_b.reshape(1, C, 1, 1)
    s = bn_gamma / jnp.sqrt(bn_var + eps)
    return ((conv - bn_mean.reshape(1, C, 1, 1)) * s.reshape(1, C, 1, 1)
            + bn_beta.reshape(1, C, 1, 1))


if __name__ == "__main__":
    # Small shapes consistent with the module: n_latent=32, out_dim=16, out_channels=4
    B, n_latent, C, out_dim = 2, 32, 4, 16

    key = jax.random.PRNGKey(0)
    kx, kfw, kfb, kcw, kcb, kg, kbt, km, kv = jax.random.split(key, 9)

    x = jax.random.normal(kx, (B, n_latent), dtype=jnp.float32)

    fc_bound = 1.0 / jnp.sqrt(jnp.float32(n_latent))
    fc_w = jax.random.uniform(kfw, (C, n_latent), minval=-fc_bound, maxval=fc_bound,
                              dtype=jnp.float32)
    fc_b = jax.random.uniform(kfb, (C,), minval=-fc_bound, maxval=fc_bound,
                              dtype=jnp.float32)

    conv_bound = 1.0 / jnp.float32(out_dim)   # 1/sqrt(1 * k * k)
    conv_w = jax.random.uniform(kcw, (C, 1, out_dim, out_dim),
                                minval=-conv_bound, maxval=conv_bound,
                                dtype=jnp.float32)
    conv_b = jax.random.uniform(kcb, (C,), minval=-conv_bound, maxval=conv_bound,
                                dtype=jnp.float32)

    bn_gamma = jax.random.uniform(kg, (C,), minval=0.5, maxval=1.5, dtype=jnp.float32)
    bn_beta = 0.1 * jax.random.normal(kbt, (C,), dtype=jnp.float32)
    bn_mean = 0.1 * jax.random.normal(km, (C,), dtype=jnp.float32)
    bn_var = jax.random.uniform(kv, (C,), minval=0.5, maxval=1.5, dtype=jnp.float32)
    eps = 1e-5

    out = resnet_dec_head(x, fc_w, fc_b, conv_w, conv_b,
                          bn_gamma, bn_beta, bn_mean, bn_var, eps=eps)
    out = jax.block_until_ready(out)

    ref = reference(x, fc_w, fc_b, conv_w, conv_b,
                    bn_gamma, bn_beta, bn_mean, bn_var, eps)
    assert out.shape == (B, C, out_dim, out_dim)
    assert jnp.allclose(out, ref, atol=1e-4, rtol=1e-4), "mismatch vs reference"

    print("KERNEL_OK")
</pallas_src>

<mosaic_0001>
module attributes {stable_mosaic.version = 11 : i64} {
  func.func @_dec_head_kernel(%arg0: i32, %arg1: memref<2x32xf32, #tpu.memory_space<vmem>>, %arg2: memref<32x1024xf32, #tpu.memory_space<vmem>>, %arg3: memref<1x1024xf32, #tpu.memory_space<vmem>>, %arg4: memref<2x1024xf32, #tpu.memory_space<vmem>>) attributes {dimension_semantics = [#tpu.dimension_semantics<parallel>], iteration_bounds = array<i64: 1>, scalar_prefetch = 0 : i64, scratch_operands = 0 : i64, tpu.core_type = #tpu.core_type<tc>, window_params = [{transform_indices = @transform_0, window_bounds = array<i64: 2, 32>}, {pipeline_mode = #tpu.pipeline_mode<synchronous>, transform_indices = @transform_1, window_bounds = array<i64: 32, 1024>}, {pipeline_mode = #tpu.pipeline_mode<synchronous>, transform_indices = @transform_2, window_bounds = array<i64: 1, 1024>}, {transform_indices = @transform_3, window_bounds = array<i64: 2, 1024>}]} {
    %c0 = arith.constant 0 : index
    %c0_0 = arith.constant 0 : index
    %0 = vector.load %arg1[%c0, %c0_0] : memref<2x32xf32, #tpu.memory_space<vmem>>, vector<2x32xf32>
    %c0_1 = arith.constant 0 : index
    %c0_2 = arith.constant 0 : index
    %1 = vector.load %arg2[%c0_1, %c0_2] : memref<32x1024xf32, #tpu.memory_space<vmem>>, vector<32x1024xf32>
    %cst = arith.constant dense<0.000000e+00> : vector<2x1024xf32>
    %2 = tpu.matmul %0, %1, %cst {dimension_numbers = #tpu.dot_dimension_numbers<[1], [0], [0], [1], [0, 0, 1, 1], [], []>} : vector<2x32xf32>, vector<32x1024xf32>, vector<2x1024xf32> -> vector<2x1024xf32>
    %c0_3 = arith.constant 0 : index
    %c0_4 = arith.constant 0 : index
    %3 = vector.load %arg3[%c0_3, %c0_4] : memref<1x1024xf32, #tpu.memory_space<vmem>>, vector<1x1024xf32>
    %4 = vector.broadcast %3 : vector<1x1024xf32> to vector<2x1024xf32>
    %5 = arith.addf %2, %4 : vector<2x1024xf32>
    %c0_5 = arith.constant 0 : index
    %c0_6 = arith.constant 0 : index
    %6 = vector.load %arg4[%c0_5, %c0_6] : memref<2x1024xf32, #tpu.memory_space<vmem>>, vector<2x1024xf32>
    tpu.vector_store %arg4[%c0_5, %c0_6], %5 {strides = array<i32>} : memref<2x1024xf32, #tpu.memory_space<vmem>>, vector<2x1024xf32>,
    return
  }
  func.func @transform_0(%arg0: i32) -> (i32, i32) {
    %c0_i32 = arith.constant 0 : i32
    %c0_i32_0 = arith.constant 0 : i32
    return %arg0, %c0_i32 : i32, i32
  }
  func.func @transform_1(%arg0: i32) -> (i32, i32) {
    %c0_i32 = arith.constant 0 : i32
    %c0_i32_0 = arith.constant 0 : i32
    %c0_i32_1 = arith.constant 0 : i32
    return %c0_i32, %c0_i32_0 : i32, i32
  }
  func.func @transform_2(%arg0: i32) -> (i32, i32) {
    %c0_i32 = arith.constant 0 : i32
    %c0_i32_0 = arith.constant 0 : i32
    %c0_i32_1 = arith.constant 0 : i32
    return %c0_i32, %c0_i32_0 : i32, i32
  }
  func.func @transform_3(%arg0: i32) -> (i32, i32) {
    %c0_i32 = arith.constant 0 : i32
    %c0_i32_0 = arith.constant 0 : i32
    return %arg0, %c0_i32 : i32, i32
  }
}

</mosaic_0001>

<llo_original>
// kernel: tpu_custom_call.1
$region0: #{tpu_custom_call.1}
  #allocation0 [shape = 'u32[]', space=smem, size = 0x4, offset = 0x4, fixed_abs, tag = 'smem constant byte address 0x4 - core index']
  #allocation1 [shape = 'u32[144,128]{1,0:T(1,128)}', space=vmem, size = 0x12000, scoped, tag = 'internal scratch']
  %s0 = inlined_call_operand.hbm [shape: f32[2,32], index: 0, kind: input, shape index: {}]
  %s1 = inlined_call_operand.hbm [shape: f32[32,1024], index: 1, kind: input, shape index: {}]
  %s2 = inlined_call_operand.hbm [shape: f32[1,1024], index: 2, kind: input, shape index: {}]
  %s3 = inlined_call_operand.hbm [shape: f32[2,1024], index: 3, kind: output, shape index: {}]
  %s4 = sld [smem:[#allocation0]]
  $region34: #{tpu_custom_call.1} parent=0
    _
  %s6 = ssub.s32 1, %s4
  %s7 = scalar_select 0, %s6, %s4
  $region1: #{tpu_custom_call.1} parent=0
    #allocation2 [shape = 'u8[1024]{0}', space=vmem, size = 0x400, scoped, tag = 'input window, operand 0, single buffered']
    #allocation3 [shape = 's32[1]{0}', space=sflag, size = 0x4, scoped, tag = 'scoped memory for tpu_custom_call.1']
    #allocation4 [shape = 's32[1]{0}', space=sflag, size = 0x4, scoped, tag = 'scoped memory for tpu_custom_call.1']
    #allocation5 [shape = 'u8[131072]{0}', space=vmem, size = 0x20000, scoped, tag = 'input window, operand 1, single buffered']
    #allocation6 [shape = 's32[1]{0}', space=sflag, size = 0x4, scoped, tag = 'scoped memory for tpu_custom_call.1']
    #allocation7 [shape = 'u8[4096]{0}', space=vmem, size = 0x1000, scoped, tag = 'input window, operand 2, single buffered']
    #allocation8 [shape = 'u8[8192]{0}', space=vmem, size = 0x2000, scoped, tag = 'output window, operand 0, single buffered']
    %8 = vsyncpa [#allocation3], 0
    %9 = vsyncpa [#allocation6], 0
    %10 = vsyncpa [#allocation4], 0
    // Predicated region
    $region2: #{tpu_custom_call.1} parent=1 // pred_check
      _
    $region3: #{tpu_custom_call.1} parent=1 // pred_check_branch
      %12 = sbr.rel (0) target = $region5
    $region4: #{tpu_custom_call.1} parent=1 // pred_region
      %s14 = ssub.s32 32, 32
      %15 = vsyncadd [#allocation3], %s14
      %s17 = sshll.u32 [#allocation2], 4
      %s18 = int_to_ptr.vmem [resolvable:$true] %s17
      %20 = dma.hbm_to_vmem [thread:$0]  %s0, 32, %s18, [#allocation3]
    $region5: #{tpu_custom_call.1} parent=1 // pred_fallthru
      _
    // Predicated region
    $region6: #{tpu_custom_call.1} parent=1 // pred_check
      _
    $region7: #{tpu_custom_call.1} parent=1 // pred_check_branch
      %22 = sbr.rel (0) target = $region9
    $region8: #{tpu_custom_call.1} parent=1 // pred_region
      %s24 = ssub.s32 4096, 4096
      %25 = vsyncadd [#allocation6], %s24
      %s26 = sshll.u32 [#allocation5], 4
      %s27 = int_to_ptr.vmem [resolvable:$true] %s26
      %32 = dma.hbm_to_vmem [thread:$0]  %s1, 4096, %s27, [#allocation6], 1024, 1024, 64
    $region9: #{tpu_custom_call.1} parent=1 // pred_fallthru
      _
    // Predicated region
    $region10: #{tpu_custom_call.1} parent=1 // pred_check
      _
    $region11: #{tpu_custom_call.1} parent=1 // pred_check_branch
      %34 = sbr.rel (0) target = $region13
    $region12: #{tpu_custom_call.1} parent=1 // pred_region
      %s36 = ssub.s32 128, 128
      %37 = vsyncadd [#allocation6], %s36
      %s39 = sshll.u32 [#allocation7], 4
      %s40 = int_to_ptr.vmem [resolvable:$true] %s39
      %42 = dma.hbm_to_vmem [thread:$0]  %s2, 128, %s40, [#allocation6]
    $region13: #{tpu_custom_call.1} parent=1 // pred_fallthru
      _
    // Predicated region
    $region14: #{tpu_custom_call.1} parent=1 // pred_check
      _
    $region15: #{tpu_custom_call.1} parent=1 // pred_check_branch
      %44 = sbr.rel (0) target = $region17
    $region16: #{tpu_custom_call.1} parent=1 // pred_region
      %45 = dma.done [#allocation3], 32
    $region17: #{tpu_custom_call.1} parent=1 // pred_fallthru
      _
    // Predicated region
    $region18: #{tpu_custom_call.1} parent=1 // pred_check
      _
    $region19: #{tpu_custom_call.1} parent=1 // pred_check_branch
      %47 = sbr.rel (0) target = $region21
    $region20: #{tpu_custom_call.1} parent=1 // pred_region
      %48 = dma.done [#allocation6], 4096
    $region21: #{tpu_custom_call.1} parent=1 // pred_fallthru
      _
    // Predicated region
    $region22: #{tpu_custom_call.1} parent=1 // pred_check
      _
    $region23: #{tpu_custom_call.1} parent=1 // pred_check_branch
      %50 = sbr.rel (0) target = $region25
    $region24: #{tpu_custom_call.1} parent=1 // pred_region
      %51 = dma.done [#allocation6], 128
    $region25: #{tpu_custom_call.1} parent=1 // pred_fallthru
      _
    %v52 = vld [vmem:[#allocation2] sm:$0x3]
    %v53 = vld [vmem:[#allocation5] sm:$0xff]
    %v54 = vld [vmem:[#allocation5 + $0x8] sm:$0xff]
    %v55 = vld [vmem:[#allocation5 + $0x10] sm:$0xff]
    %v56 = vld [vmem:[#allocation5 + $0x18] sm:$0xff]
    %v57 = vld [vmem:[#allocation5 + $0x20] sm:$0xff]
    %v58 = vld [vmem:[#allocation5 + $0x28] sm:$0xff]
    %v59 = vld [vmem:[#allocation5 + $0x30] sm:$0xff]
    %v60 = vld [vmem:[#allocation5 + $0x38] sm:$0xff]
    %v61 = vld [vmem:[#allocation5 + $0x40] sm:$0xff]
    %v62 = vld [vmem:[#allocation5 + $0x48] sm:$0xff]
    %v63 = vld [vmem:[#allocation5 + $0x50] sm:$0xff]
    %v64 = vld [vmem:[#allocation5 + $0x58] sm:$0xff]
    %v65 = vld [vmem:[#allocation5 + $0x60] sm:$0xff]
    %v66 = vld [vmem:[#allocation5 + $0x68] sm:$0xff]
    %v67 = vld [vmem:[#allocation5 + $0x70] sm:$0xff]
    %v68 = vld [vmem:[#allocation5 + $0x78] sm:$0xff]
    %v69 = vld [vmem:[#allocation5 + $0x80] sm:$0xff]
    %v70 = vld [vmem:[#allocation5 + $0x88] sm:$0xff]
    %v71 = vld [vmem:[#allocation5 + $0x90] sm:$0xff]
    %v72 = vld [vmem:[#allocation5 + $0x98] sm:$0xff]
    %v73 = vld [vmem:[#allocation5 + $0xa0] sm:$0xff]
    %v74 = vld [vmem:[#allocation5 + $0xa8] sm:$0xff]
    %v75 = vld [vmem:[#allocation5 + $0xb0] sm:$0xff]
    %v76 = vld [vmem:[#allocation5 + $0xb8] sm:$0xff]
    %v77 = vld [vmem:[#allocation5 + $0xc0] sm:$0xff]
    %v78 = vld [vmem:[#allocation5 + $0xc8] sm:$0xff]
    %v79 = vld [vmem:[#allocation5 + $0xd0] sm:$0xff]
    %v80 = vld [vmem:[#allocation5 + $0xd8] sm:$0xff]
    %v81 = vld [vmem:[#allocation5 + $0xe0] sm:$0xff]
    %v82 = vld [vmem:[#allocation5 + $0xe8] sm:$0xff]
    %v83 = vld [vmem:[#allocation5 + $0xf0] sm:$0xff]
    %v84 = vld [vmem:[#allocation5 + $0xf8] sm:$0xff]
    %v85 = vld [vmem:[#allocation7] sm:$0xff]
    %v87 = vlaneseq
    %v88 = vshrl.u32 %v87, 7
    %v89 = vsub.s32 0, %v88
    %v90 = vrot.slane %v85, %v89
    %v91 = vlaneseq
    %v92 = vshrl.u32 %v91, 7
    %v93 = vsub.s32 1, %v92
    %v94 = vrot.slane %v85, %v93
    %v95 = vlaneseq
    %v96 = vshrl.u32 %v95, 7
    %v97 = vsub.s32 2, %v96
    %v98 = vrot.slane %v85, %v97
    %v99 = vlaneseq
    %v100 = vshrl.u32 %v99, 7
    %v101 = vsub.s32 3, %v100
    %v102 = vrot.slane %v85, %v101
    %v103 = vlaneseq
    %v104 = vshrl.u32 %v103, 7
    %v105 = vsub.s32 4, %v104
    %v106 = vrot.slane %v85, %v105
    %v107 = vlaneseq
    %v108 = vshrl.u32 %v107, 7
    %v109 = vsub.s32 5, %v108
    %v110 = vrot.slane %v85, %v109
    %v111 = vlaneseq
    %v112 = vshrl.u32 %v111, 7
    %v113 = vsub.s32 6, %v112
    %v114 = vrot.slane %v85, %v113
    %v115 = vlaneseq
    %v116 = vshrl.u32 %v115, 7
    %v117 = vsub.s32 7, %v116
    %v118 = vrot.slane %v85, %v117
    %vm127 = vcmask 261120
    %v129 = vsel %vm127, %v52, 0
    %131 = vmatprep.subr.mxu0 %v54
    %132 = vmatpush1.msra.mxu0 %v53
    %133 = vmatprep.subr.mxu0 %v62
    %134 = vmatpush1.msra.mxu0 %v61
    %135 = vmatprep.subr.mxu0 %v70
    %136 = vmatpush1.msra.mxu0 %v69
    %137 = vmatprep.subr.mxu0 %v78
    %138 = vmatpush1.msra.mxu0 %v77
    %139 = vmatprep.subr.mxu0 0.0
    %140 = vmatpush1.msra.mxu0 0.0
    %141 = vmatprep.subr.mxu0 0.0
    %142 = vmatpush1.msra.mxu0 0.0
    %143 = vmatprep.subr.mxu0 0.0
    %144 = vmatpush1.msra.mxu0 0.0
    %145 = vmatprep.subr.mxu0 0.0
    %146 = vmatpush1.msra.mxu0 0.0
    %147 = vmatprep.subr.mxu0 0.0
    %148 = vmatpush1.msra.mxu0 0.0
    %149 = vmatprep.subr.mxu0 0.0
    %150 = vmatpush1.msra.mxu0 0.0
    %151 = vmatprep.subr.mxu0 0.0
    %152 = vmatpush1.msra.mxu0 0.0
    %153 = vmatprep.subr.mxu0 0.0
    %154 = vmatpush1.msra.mxu0 0.0
    %155 = vmatprep.subr.mxu0 0.0
    %156 = vmatpush1.msra.mxu0 0.0
    %157 = vmatprep.subr.mxu0 0.0
    %158 = vmatpush1.msra.mxu0 0.0
    %159 = vmatprep.subr.mxu0 0.0
    %160 = vmatpush1.msra.mxu0 0.0
    %161 = vmatprep.subr.mxu0 0.0
    %162 = vmatpush1.msra.mxu0 0.0
    %163 = vmatprep.subr.mxu0 0.0
    %164 = vmatpush1.msra.mxu0 0.0
    %165 = vmatprep.subr.mxu0 0.0
    %166 = vmatpush1.msra.mxu0 0.0
    %167 = vmatprep.subr.mxu0 0.0
    %168 = vmatpush1.msra.mxu0 0.0
    %169 = vmatprep.subr.mxu0 0.0
    %170 = vmatpush1.msra.mxu0 0.0
    %171 = vmatprep.subr.mxu0 0.0
    %172 = vmatpush1.msra.mxu0 0.0
    %173 = vmatprep.subr.mxu0 0.0
    %174 = vmatpush1.msra.mxu0 0.0
    %175 = vmatprep.subr.mxu0 0.0
    %176 = vmatpush1.msra.mxu0 0.0
    %177 = vmatprep.subr.mxu0 0.0
    %178 = vmatpush1.msra.mxu0 0.0
    %179 = vmatprep.subr.mxu0 0.0
    %180 = vmatpush1.msra.mxu0 0.0
    %181 = vmatprep.subr.mxu0 0.0
    %182 = vmatpush1.msra.mxu0 0.0
    %183 = vmatprep.subr.mxu0 0.0
    %184 = vmatpush1.msra.mxu0 0.0
    %185 = vmatprep.subr.mxu0 0.0
    %186 = vmatpush1.msra.mxu0 0.0
    %187 = vmatprep.subr.mxu0 0.0
    %188 = vmatpush1.msra.mxu0 0.0
    %189 = vmatprep.subr.mxu0 0.0
    %190 = vmatpush1.msra.mxu0 0.0
    %191 = vmatprep.subr.mxu0 0.0
    %192 = vmatpush1.msra.mxu0 0.0
    %193 = vmatprep.subr.mxu0 0.0
    %194 = vmatpush1.msra.mxu0 0.0
    %195 = vmatprep.mubr.f32.mxu0 0.0
    %196 = vmatmul.mubr.f32.gmra.mrb[0].mxu0 %v129
    %v197 = vpop.f32.mrb[0].mxu0
    %v198 = vadd.f32 %v90, %v197
    %v199 = vpop.f32.mrb[0].mxu0
    %v200 = vadd.f32 %v94, %v199
    %201 = vdwg.mxu0
    %202 = vmatprep.subr.mxu0 %v56
    %203 = vmatpush1.msra.mxu0 %v55
    %204 = vmatprep.subr.mxu0 %v64
    %205 = vmatpush1.msra.mxu0 %v63
    %206 = vmatprep.subr.mxu0 %v72
    %207 = vmatpush1.msra.mxu0 %v71
    %208 = vmatprep.subr.mxu0 %v80
    %209 = vmatpush1.msra.mxu0 %v79
    %210 = vmatprep.subr.mxu0 0.0
    %211 = vmatpush1.msra.mxu0 0.0
    %212 = vmatprep.subr.mxu0 0.0
    %213 = vmatpush1.msra.mxu0 0.0
    %214 = vmatprep.subr.mxu0 0.0
    %215 = vmatpush1.msra.mxu0 0.0
    %216 = vmatprep.subr.mxu0 0.0
    %217 = vmatpush1.msra.mxu0 0.0
    %218 = vmatprep.subr.mxu0 0.0
    %219 = vmatpush1.msra.mxu0 0.0
    %220 = vmatprep.subr.mxu0 0.0
    %221 = vmatpush1.msra.mxu0 0.0
    %222 = vmatprep.subr.mxu0 0.0
    %223 = vmatpush1.msra.mxu0 0.0
    %224 = vmatprep.subr.mxu0 0.0
    %225 = vmatpush1.msra.mxu0 0.0
    %226 = vmatprep.subr.mxu0 0.0
    %227 = vmatpush1.msra.mxu0 0.0
    %228 = vmatprep.subr.mxu0 0.0
    %229 = vmatpush1.msra.mxu0 0.0
    %230 = vmatprep.subr.mxu0 0.0
    %231 = vmatpush1.msra.mxu0 0.0
    %232 = vmatprep.subr.mxu0 0.0
    %233 = vmatpush1.msra.mxu0 0.0
    %234 = vmatprep.subr.mxu0 0.0
    %235 = vmatpush1.msra.mxu0 0.0
    %236 = vmatprep.subr.mxu0 0.0
    %237 = vmatpush1.msra.mxu0 0.0
    %238 = vmatprep.subr.mxu0 0.0
    %239 = vmatpush1.msra.mxu0 0.0
    %240 = vmatprep.subr.mxu0 0.0
    %241 = vmatpush1.msra.mxu0 0.0
    %242 = vmatprep.subr.mxu0 0.0
    %243 = vmatpush1.msra.mxu0 0.0
    %244 = vmatprep.subr.mxu0 0.0
    %245 = vmatpush1.msra.mxu0 0.0
    %246 = vmatprep.subr.mxu0 0.0
    %247 = vmatpush1.msra.mxu0 0.0
    %248 = vmatprep.subr.mxu0 0.0
    %249 = vmatpush1.msra.mxu0 0.0
    %250 = vmatprep.subr.mxu0 0.0
    %251 = vmatpush1.msra.mxu0 0.0
    %252 = vmatprep.subr.mxu0 0.0
    %253 = vmatpush1.msra.mxu0 0.0
    %254 = vmatprep.subr.mxu0 0.0
    %255 = vmatpush1.msra.mxu0 0.0
    %256 = vmatprep.subr.mxu0 0.0
    %257 = vmatpush1.msra.mxu0 0.0
    %258 = vmatprep.subr.mxu0 0.0
    %259 = vmatpush1.msra.mxu0 0.0
    %260 = vmatprep.subr.mxu0 0.0
    %261 = vmatpush1.msra.mxu0 0.0
    %262 = vmatprep.subr.mxu0 0.0
    %263 = vmatpush1.msra.mxu0 0.0
    %264 = vmatprep.subr.mxu0 0.0
    %265 = vmatpush1.msra.mxu0 0.0
    %266 = vmatprep.mubr.f32.mxu0 0.0
    %267 = vmatmul.mubr.f32.gmra.mrb[0].mxu0 %v129
    %v268 = vpop.f32.mrb[0].mxu0
    %v269 = vadd.f32 %v98, %v268
    %v270 = vpop.f32.mrb[0].mxu0
    %v271 = vadd.f32 %v102, %v270
    %272 = vdwg.mxu0
    %273 = vmatprep.subr.mxu0 %v58
    %274 = vmatpush1.msra.mxu0 %v57
    %275 = vmatprep.subr.mxu0 %v66
    %276 = vmatpush1.msra.mxu0 %v65
    %277 = vmatprep.subr.mxu0 %v74
    %278 = vmatpush1.msra.mxu0 %v73
    %279 = vmatprep.subr.mxu0 %v82
    %280 = vmatpush1.msra.mxu0 %v81
    %281 = vmatprep.subr.mxu0 0.0
    %282 = vmatpush1.msra.mxu0 0.0
    %283 = vmatprep.subr.mxu0 0.0
    %284 = vmatpush1.msra.mxu0 0.0
    %285 = vmatprep.subr.mxu0 0.0
    %286 = vmatpush1.msra.mxu0 0.0
    %287 = vmatprep.subr.mxu0 0.0
    %288 = vmatpush1.msra.mxu0 0.0
    %289 = vmatprep.subr.mxu0 0.0
    %290 = vmatpush1.msra.mxu0 0.0
    %291 = vmatprep.subr.mxu0 0.0
    %292 = vmatpush1.msra.mxu0 0.0
    %293 = vmatprep.subr.mxu0 0.0
    %294 = vmatpush1.msra.mxu0 0.0
    %295 = vmatprep.subr.mxu0 0.0
    %296 = vmatpush1.msra.mxu0 0.0
    %297 = vmatprep.subr.mxu0 0.0
    %298 = vmatpush1.msra.mxu0 0.0
    %299 = vmatprep.subr.mxu0 0.0
    %300 = vmatpush1.msra.mxu0 0.0
    %301 = vmatprep.subr.mxu0 0.0
    %302 = vmatpush1.msra.mxu0 0.0
    %303 = vmatprep.subr.mxu0 0.0
    %304 = vmatpush1.msra.mxu0 0.0
    %305 = vmatprep.subr.mxu0 0.0
    %306 = vmatpush1.msra.mxu0 0.0
    %307 = vmatprep.subr.mxu0 0.0
    %308 = vmatpush1.msra.mxu0 0.0
    %309 = vmatprep.subr.mxu0 0.0
    %310 = vmatpush1.msra.mxu0 0.0
    %311 = vmatprep.subr.mxu0 0.0
    %312 = vmatpush1.msra.mxu0 0.0
    %313 = vmatprep.subr.mxu0 0.0
    %314 = vmatpush1.msra.mxu0 0.0
    %315 = vmatprep.subr.mxu0 0.0
    %316 = vmatpush1.msra.mxu0 0.0
    %317 = vmatprep.subr.mxu0 0.0
    %318 = vmatpush1.msra.mxu0 0.0
    %319 = vmatprep.subr.mxu0 0.0
    %320 = vmatpush1.msra.mxu0 0.0
    %321 = vmatprep.subr.mxu0 0.0
    %322 = vmatpush1.msra.mxu0 0.0
    %323 = vmatprep.subr.mxu0 0.0
    %324 = vmatpush1.msra.mxu0 0.0
    %325 = vmatprep.subr.mxu0 0.0
    %326 = vmatpush1.msra.mxu0 0.0
    %327 = vmatprep.subr.mxu0 0.0
    %328 = vmatpush1.msra.mxu0 0.0
    %329 = vmatprep.subr.mxu0 0.0
    %330 = vmatpush1.msra.mxu0 0.0
    %331 = vmatprep.subr.mxu0 0.0
    %332 = vmatpush1.msra.mxu0 0.0
    %333 = vmatprep.subr.mxu0 0.0
    %334 = vmatpush1.msra.mxu0 0.0
    %335 = vmatprep.subr.mxu0 0.0
    %336 = vmatpush1.msra.mxu0 0.0
    %337 = vmatprep.mubr.f32.mxu0 0.0
    %338 = vmatmul.mubr.f32.gmra.mrb[0].mxu0 %v129
    %v339 = vpop.f32.mrb[0].mxu0
    %v340 = vadd.f32 %v106, %v339
    %v341 = vpop.f32.mrb[0].mxu0
    %v342 = vadd.f32 %v110, %v341
    %343 = vdwg.mxu0
    %344 = vmatprep.subr.mxu0 %v60
    %345 = vmatpush1.msra.mxu0 %v59
    %346 = vmatprep.subr.mxu0 %v68
    %347 = vmatpush1.msra.mxu0 %v67
    %348 = vmatprep.subr.mxu0 %v76
    %349 = vmatpush1.msra.mxu0 %v75
    %350 = vmatprep.subr.mxu0 %v84
    %351 = vmatpush1.msra.mxu0 %v83
    %352 = vmatprep.subr.mxu0 0.0
    %353 = vmatpush1.msra.mxu0 0.0
    %354 = vmatprep.subr.mxu0 0.0
    %355 = vmatpush1.msra.mxu0 0.0
    %356 = vmatprep.subr.mxu0 0.0
    %357 = vmatpush1.msra.mxu0 0.0
    %358 = vmatprep.subr.mxu0 0.0
    %359 = vmatpush1.msra.mxu0 0.0
    %360 = vmatprep.subr.mxu0 0.0
    %361 = vmatpush1.msra.mxu0 0.0
    %362 = vmatprep.subr.mxu0 0.0
    %363 = vmatpush1.msra.mxu0 0.0
    %364 = vmatprep.subr.mxu0 0.0
    %365 = vmatpush1.msra.mxu0 0.0
    %366 = vmatprep.subr.mxu0 0.0
    %367 = vmatpush1.msra.mxu0 0.0
    %368 = vmatprep.subr.mxu0 0.0
    %369 = vmatpush1.msra.mxu0 0.0
    %370 = vmatprep.subr.mxu0 0.0
    %371 = vmatpush1.msra.mxu0 0.0
    %372 = vmatprep.subr.mxu0 0.0
    %373 = vmatpush1.msra.mxu0 0.0
    %374 = vmatprep.subr.mxu0 0.0
    %375 = vmatpush1.msra.mxu0 0.0
    %376 = vmatprep.subr.mxu0 0.0
    %377 = vmatpush1.msra.mxu0 0.0
    %378 = vmatprep.subr.mxu0 0.0
    %379 = vmatpush1.msra.mxu0 0.0
    %380 = vmatprep.subr.mxu0 0.0
    %381 = vmatpush1.msra.mxu0 0.0
    %382 = vmatprep.subr.mxu0 0.0
    %383 = vmatpush1.msra.mxu0 0.0
    %384 = vmatprep.subr.mxu0 0.0
    %385 = vmatpush1.msra.mxu0 0.0
    %386 = vmatprep.subr.mxu0 0.0
    %387 = vmatpush1.msra.mxu0 0.0
    %388 = vmatprep.subr.mxu0 0.0
    %389 = vmatpush1.msra.mxu0 0.0
    %390 = vmatprep.subr.mxu0 0.0
    %391 = vmatpush1.msra.mxu0 0.0
    %392 = vmatprep.subr.mxu0 0.0
    %393 = vmatpush1.msra.mxu0 0.0
    %394 = vmatprep.subr.mxu0 0.0
    %395 = vmatpush1.msra.mxu0 0.0
    %396 = vmatprep.subr.mxu0 0.0
    %397 = vmatpush1.msra.mxu0 0.0
    %398 = vmatprep.subr.mxu0 0.0
    %399 = vmatpush1.msra.mxu0 0.0
    %400 = vmatprep.subr.mxu0 0.0
    %401 = vmatpush1.msra.mxu0 0.0
    %402 = vmatprep.subr.mxu0 0.0
    %403 = vmatpush1.msra.mxu0 0.0
    %404 = vmatprep.subr.mxu0 0.0
    %405 = vmatpush1.msra.mxu0 0.0
    %406 = vmatprep.subr.mxu0 0.0
    %407 = vmatpush1.msra.mxu0 0.0
    %408 = vmatprep.mubr.f32.mxu0 0.0
    %409 = vmatmul.mubr.f32.gmra.mrb[0].mxu0 %v129
    %v410 = vpop.f32.mrb[0].mxu0
    %v411 = vadd.f32 %v114, %v410
    %v412 = vpop.f32.mrb[0].mxu0
    %v413 = vadd.f32 %v118, %v412
    %414 = vdwg.mxu0
    %v423 = vcombine.low %v198, %v200
    %v424 = vcombine.low %v269, %v271
    %v426 = vunpack.c.l.s4 1983009808
    %v427 = vunpack.c.0.s8 %v426
    %v428 = vlaneseq
    %v429 = vshrl.u32 %v428, 7
    %v430 = vsub.s32 %v427, %v429
    %v431 = vrot.slane %v423, %v430
    %v433 = vunpack.c.l.s4 1983009808
    %v434 = vunpack.c.0.s8 %v433
    %v435 = vlaneseq
    %v436 = vshrl.u32 %v435, 7
    %v437 = vsub.s32 %v434, %v436
    %v438 = vrot.slane %v424, %v437
    %v439 = vcombine.low %v431, %v438
    %v440 = vcombine.low %v340, %v342
    %v441 = vcombine.low %v411, %v413
    %v443 = vunpack.c.l.s4 1983009808
    %v444 = vunpack.c.0.s8 %v443
    %v445 = vlaneseq
    %v446 = vshrl.u32 %v445, 7
    %v447 = vsub.s32 %v444, %v446
    %v448 = vrot.slane %v440, %v447
    %v450 = vunpack.c.l.s4 1983009808
    %v451 = vunpack.c.0.s8 %v450
    %v452 = vlaneseq
    %v453 = vshrl.u32 %v452, 7
    %v454 = vsub.s32 %v451, %v453
    %v455 = vrot.slane %v441, %v454
    %v456 = vcombine.low %v448, %v455
    %459 = vst [vmem:[#allocation8] sm:$0xff] %v439
    %460 = vst [vmem:[#allocation8 + $0x8] sm:$0xff] %v456
    // Predicated region
    $region26: #{tpu_custom_call.1} parent=1 // pred_check
      _
    $region27: #{tpu_custom_call.1} parent=1 // pred_check_branch
      %462 = sbr.rel (0) target = $region29
    $region28: #{tpu_custom_call.1} parent=1 // pred_region
      %s464 = ssub.s32 256, 256
      %465 = vsyncadd [#allocation4], %s464
      %s467 = sshll.u32 [#allocation8], 4
      %s468 = int_to_ptr.vmem [resolvable:$true] %s467
      %470 = dma.vmem_to_hbm [thread:$0]  %s468, 256, %s3, [#allocation4]
    $region29: #{tpu_custom_call.1} parent=1 // pred_fallthru
      _
    // Predicated region
    $region30: #{tpu_custom_call.1} parent=1 // pred_check
      _
    $region31: #{tpu_custom_call.1} parent=1 // pred_check_branch
      %472 = sbr.rel (0) target = $region33
    $region32: #{tpu_custom_call.1} parent=1 // pred_region
      %473 = dma.done [#allocation4], 256
    $region33: #{tpu_custom_call.1} parent=1 // pred_fallthru
      _
    %474 = vsyncpa [#allocation3], 1
    %475 = vsyncpa [#allocation6], 1
    %476 = vsyncpa [#allocation4], 1

</llo_original>
